<compile_context>
chip_gen: v7x
topology: tpu7x:2x2x1
jax: 0.10.0
libtpu: 0.0.40
codegen_flags: <defaults>
</compile_context>

<pallas_src>
import jax
import jax.numpy as jnp
from jax.experimental import pallas as pl
from jax.experimental.pallas import tpu as pltpu


def _round_up(x, m):
    return (x + m - 1) // m * m


# ----------------------------------------------------------------------------
# fused kernel: one-hot embedding lookup -> Linear -> Swish -> Linear
# ----------------------------------------------------------------------------
def _cond_emb_kernel(lab_ref, emb_ref, w1_ref, b1_ref, w2_ref, b2_ref, o_ref):
    # lab_ref: (TM, 1) int32 labels for this M tile
    # emb_ref: (Vp, Dp) embedding table (row 0 = padding row, zeros)
    # w1_ref : (Dp, Np), b1_ref: (1, Np)
    # w2_ref : (Np, Np), b2_ref: (1, Np)
    # o_ref  : (TM, Np)
    labels = lab_ref[...]                                        # (TM, 1) int32
    tm = labels.shape[0]
    vp = emb_ref.shape[0]

    # Embedding lookup as an MXU matmul: onehot(labels) @ table.
    col_ids = jax.lax.broadcasted_iota(jnp.int32, (tm, vp), 1)   # (TM, Vp)
    onehot = (col_ids == labels).astype(jnp.float32)             # (TM, Vp)
    emb = jnp.dot(onehot, emb_ref[...].astype(jnp.float32),
                  preferred_element_type=jnp.float32)            # (TM, Dp)

    # Linear(d_model -> dim) + Swish
    h = jnp.dot(emb, w1_ref[...].astype(jnp.float32),
                preferred_element_type=jnp.float32) + b1_ref[...]
    h = h * jax.nn.sigmoid(h)

    # Linear(dim -> dim)
    out = jnp.dot(h, w2_ref[...].astype(jnp.float32),
                  preferred_element_type=jnp.float32) + b2_ref[...]
    o_ref[...] = out.astype(o_ref.dtype)


# ----------------------------------------------------------------------------
# wrapper: padding / tiling glue + pallas_call
# ----------------------------------------------------------------------------
def conditional_embedding(t, emb_table, w1, b1, w2, b2, *, max_tile_m=128):
    """ConditionalEmbedding forward.  t: int labels of any shape."""
    lead_shape = t.shape
    t_flat = t.reshape(-1).astype(jnp.int32)
    B = t_flat.shape[0]
    V, d_model = emb_table.shape
    dim = w1.shape[1]
    assert w1.shape == (d_model, dim) and w2.shape == (dim, dim)

    # M tile: multiple of 8 sublanes, capped at max_tile_m.  Small batches get
    # a single just-big-enough tile instead of a padded 128-row tile.
    tile_m = min(_round_up(max(B, 1), 8), max_tile_m)

    # Pad for TPU layout: lane-dense (multiple-of-128) feature and vocab dims.
    # Zero padding keeps the math exact (padded rows hit the zero padding row).
    Bp = _round_up(max(B, 1), tile_m)
    Vp = _round_up(V, 128)
    Dp = _round_up(d_model, 128)
    Np = _round_up(dim, 128)

    labels = jnp.zeros((Bp, 1), jnp.int32).at[:B, 0].set(t_flat)
    emb_p = jnp.zeros((Vp, Dp), jnp.float32).at[:V, :d_model].set(emb_table)
    w1_p = jnp.zeros((Dp, Np), jnp.float32).at[:d_model, :dim].set(w1)
    b1_p = jnp.zeros((1, Np), jnp.float32).at[:, :dim].set(b1.reshape(1, dim))
    w2_p = jnp.zeros((Np, Np), jnp.float32).at[:dim, :dim].set(w2)
    b2_p = jnp.zeros((1, Np), jnp.float32).at[:, :dim].set(b2.reshape(1, dim))

    grid = (Bp // tile_m,)
    out = pl.pallas_call(
        _cond_emb_kernel,
        out_shape=jax.ShapeDtypeStruct((Bp, Np), jnp.float32),
        grid=grid,
        in_specs=[
            pl.BlockSpec((tile_m, 1), lambda i: (i, 0)),    # labels (per M tile)
            pl.BlockSpec((Vp, Dp), lambda i: (0, 0)),       # embedding table (resident)
            pl.BlockSpec((Dp, Np), lambda i: (0, 0)),       # w1 (resident)
            pl.BlockSpec((1, Np), lambda i: (0, 0)),        # b1
            pl.BlockSpec((Np, Np), lambda i: (0, 0)),       # w2 (resident)
            pl.BlockSpec((1, Np), lambda i: (0, 0)),        # b2
        ],
        out_specs=pl.BlockSpec((tile_m, Np), lambda i: (i, 0)),
        compiler_params=pltpu.CompilerParams(
            dimension_semantics=("parallel",),
            vmem_limit_bytes=32 * 1024 * 1024,
        ),
    )(labels, emb_p, w1_p, b1_p, w2_p, b2_p)

    return out[:B, :dim].reshape(lead_shape + (dim,))


# ----------------------------------------------------------------------------
# pure-JAX reference (same math, no Pallas) for correctness check
# ----------------------------------------------------------------------------
def ref_forward(t, emb_table, w1, b1, w2, b2):
    emb = emb_table[t]                       # row 0 is zeros (padding_idx=0)
    h = emb @ w1 + b1
    h = h * jax.nn.sigmoid(h)                # Swish
    return h @ w2 + b2


# ----------------------------------------------------------------------------
if __name__ == "__main__":
    num_labels, d_model, dim, B = 10, 32, 64, 8     # d_model % 2 == 0
    key = jax.random.PRNGKey(0)
    k_t, k_e, k_w1, k_b1, k_w2, k_b2 = jax.random.split(key, 6)

    t = jax.random.randint(k_t, (B,), 0, num_labels + 1, dtype=jnp.int32)
    emb_table = jax.random.normal(k_e, (num_labels + 1, d_model), jnp.float32)
    emb_table = emb_table.at[0].set(0.0)            # padding_idx=0 row is zeros

    lim1 = 1.0 / (d_model ** 0.5)
    w1 = jax.random.uniform(k_w1, (d_model, dim), jnp.float32, -lim1, lim1)
    b1 = jax.random.uniform(k_b1, (dim,), jnp.float32, -lim1, lim1)
    lim2 = 1.0 / (dim ** 0.5)
    w2 = jax.random.uniform(k_w2, (dim, dim), jnp.float32, -lim2, lim2)
    b2 = jax.random.uniform(k_b2, (dim,), jnp.float32, -lim2, lim2)

    out = conditional_embedding(t, emb_table, w1, b1, w2, b2)
    out = jax.block_until_ready(out)
    assert out.shape == (B, dim)

    ref = ref_forward(t, emb_table, w1, b1, w2, b2)
    max_err = float(jnp.max(jnp.abs(out - ref)))
    if not bool(jnp.allclose(out, ref, rtol=2e-3, atol=2e-3)):
        raise AssertionError(f"Pallas output mismatch vs reference, max abs err = {max_err}")

    print("KERNEL_OK")
</pallas_src>

<mosaic_0001>
module attributes {stable_mosaic.version = 11 : i64} {
  func.func @_cond_emb_kernel(%arg0: i32, %arg1: memref<8x1xi32, #tpu.memory_space<vmem>>, %arg2: memref<128x128xf32, #tpu.memory_space<vmem>>, %arg3: memref<128x128xf32, #tpu.memory_space<vmem>>, %arg4: memref<1x128xf32, #tpu.memory_space<vmem>>, %arg5: memref<128x128xf32, #tpu.memory_space<vmem>>, %arg6: memref<1x128xf32, #tpu.memory_space<vmem>>, %arg7: memref<8x128xf32, #tpu.memory_space<vmem>>) attributes {dimension_semantics = [#tpu.dimension_semantics<parallel>], iteration_bounds = array<i64: 1>, scalar_prefetch = 0 : i64, scratch_operands = 0 : i64, tpu.core_type = #tpu.core_type<tc>, window_params = [{transform_indices = @transform_0, window_bounds = array<i64: 8, 1>}, {pipeline_mode = #tpu.pipeline_mode<synchronous>, transform_indices = @transform_1, window_bounds = array<i64: 128, 128>}, {pipeline_mode = #tpu.pipeline_mode<synchronous>, transform_indices = @transform_2, window_bounds = array<i64: 128, 128>}, {pipeline_mode = #tpu.pipeline_mode<synchronous>, transform_indices = @transform_3, window_bounds = array<i64: 1, 128>}, {pipeline_mode = #tpu.pipeline_mode<synchronous>, transform_indices = @transform_4, window_bounds = array<i64: 128, 128>}, {pipeline_mode = #tpu.pipeline_mode<synchronous>, transform_indices = @transform_5, window_bounds = array<i64: 1, 128>}, {transform_indices = @transform_6, window_bounds = array<i64: 8, 128>}]} {
    %c0 = arith.constant 0 : index
    %c0_0 = arith.constant 0 : index
    %0 = vector.load %arg1[%c0, %c0_0] : memref<8x1xi32, #tpu.memory_space<vmem>>, vector<8x1xi32>
    %1 = tpu.iota {dimensions = array<i32: 1>} : vector<8x128xi32>
    %2 = vector.broadcast %0 : vector<8x1xi32> to vector<8x128xi32>
    %3 = arith.cmpi eq, %1, %2 : vector<8x128xi32>
    %4 = arith.extui %3 : vector<8x128xi1> to vector<8x128xi32>
    %5 = arith.sitofp %4 : vector<8x128xi32> to vector<8x128xf32>
    %c0_1 = arith.constant 0 : index
    %c0_2 = arith.constant 0 : index
    %6 = vector.load %arg2[%c0_1, %c0_2] : memref<128x128xf32, #tpu.memory_space<vmem>>, vector<128x128xf32>
    %cst = arith.constant dense<0.000000e+00> : vector<8x128xf32>
    %7 = tpu.matmul %5, %6, %cst {dimension_numbers = #tpu.dot_dimension_numbers<[1], [0], [0], [1], [0, 0, 1, 1], [], []>} : vector<8x128xf32>, vector<128x128xf32>, vector<8x128xf32> -> vector<8x128xf32>
    %c0_3 = arith.constant 0 : index
    %c0_4 = arith.constant 0 : index
    %8 = vector.load %arg3[%c0_3, %c0_4] : memref<128x128xf32, #tpu.memory_space<vmem>>, vector<128x128xf32>
    %cst_5 = arith.constant dense<0.000000e+00> : vector<8x128xf32>
    %9 = tpu.matmul %7, %8, %cst_5 {dimension_numbers = #tpu.dot_dimension_numbers<[1], [0], [0], [1], [0, 0, 1, 1], [], []>} : vector<8x128xf32>, vector<128x128xf32>, vector<8x128xf32> -> vector<8x128xf32>
    %c0_6 = arith.constant 0 : index
    %c0_7 = arith.constant 0 : index
    %10 = vector.load %arg4[%c0_6, %c0_7] : memref<1x128xf32, #tpu.memory_space<vmem>>, vector<1x128xf32>
    %11 = vector.broadcast %10 : vector<1x128xf32> to vector<8x128xf32>
    %12 = arith.addf %9, %11 : vector<8x128xf32>
    %13 = arith.negf %12 : vector<8x128xf32>
    %14 = math.exp %13 : vector<8x128xf32>
    %cst_8 = arith.constant 1.000000e+00 : f32
    %15 = vector.broadcast %cst_8 : f32 to vector<8x128xf32>
    %16 = arith.addf %15, %14 : vector<8x128xf32>
    %17 = arith.divf %15, %16 : vector<8x128xf32>
    %18 = arith.mulf %12, %17 : vector<8x128xf32>
    %c0_9 = arith.constant 0 : index
    %c0_10 = arith.constant 0 : index
    %19 = vector.load %arg5[%c0_9, %c0_10] : memref<128x128xf32, #tpu.memory_space<vmem>>, vector<128x128xf32>
    %cst_11 = arith.constant dense<0.000000e+00> : vector<8x128xf32>
    %20 = tpu.matmul %18, %19, %cst_11 {dimension_numbers = #tpu.dot_dimension_numbers<[1], [0], [0], [1], [0, 0, 1, 1], [], []>} : vector<8x128xf32>, vector<128x128xf32>, vector<8x128xf32> -> vector<8x128xf32>
    %c0_12 = arith.constant 0 : index
    %c0_13 = arith.constant 0 : index
    %21 = vector.load %arg6[%c0_12, %c0_13] : memref<1x128xf32, #tpu.memory_space<vmem>>, vector<1x128xf32>
    %22 = vector.broadcast %21 : vector<1x128xf32> to vector<8x128xf32>
    %23 = arith.addf %20, %22 : vector<8x128xf32>
    %c0_14 = arith.constant 0 : index
    %c0_15 = arith.constant 0 : index
    %24 = vector.load %arg7[%c0_14, %c0_15] : memref<8x128xf32, #tpu.memory_space<vmem>>, vector<8x128xf32>
    tpu.vector_store %arg7[%c0_14, %c0_15], %23 {strides = array<i32>} : memref<8x128xf32, #tpu.memory_space<vmem>>, vector<8x128xf32>,
    return
  }
  func.func @transform_0(%arg0: i32) -> (i32, i32) {
    %c0_i32 = arith.constant 0 : i32
    %c0_i32_0 = arith.constant 0 : i32
    return %arg0, %c0_i32 : i32, i32
  }
  func.func @transform_1(%arg0: i32) -> (i32, i32) {
    %c0_i32 = arith.constant 0 : i32
    %c0_i32_0 = arith.constant 0 : i32
    %c0_i32_1 = arith.constant 0 : i32
    return %c0_i32, %c0_i32_0 : i32, i32
  }
  func.func @transform_2(%arg0: i32) -> (i32, i32) {
    %c0_i32 = arith.constant 0 : i32
    %c0_i32_0 = arith.constant 0 : i32
    %c0_i32_1 = arith.constant 0 : i32
    return %c0_i32, %c0_i32_0 : i32, i32
  }
  func.func @transform_3(%arg0: i32) -> (i32, i32) {
    %c0_i32 = arith.constant 0 : i32
    %c0_i32_0 = arith.constant 0 : i32
    %c0_i32_1 = arith.constant 0 : i32
    return %c0_i32, %c0_i32_0 : i32, i32
  }
  func.func @transform_4(%arg0: i32) -> (i32, i32) {
    %c0_i32 = arith.constant 0 : i32
    %c0_i32_0 = arith.constant 0 : i32
    %c0_i32_1 = arith.constant 0 : i32
    return %c0_i32, %c0_i32_0 : i32, i32
  }
  func.func @transform_5(%arg0: i32) -> (i32, i32) {
    %c0_i32 = arith.constant 0 : i32
    %c0_i32_0 = arith.constant 0 : i32
    %c0_i32_1 = arith.constant 0 : i32
    return %c0_i32, %c0_i32_0 : i32, i32
  }
  func.func @transform_6(%arg0: i32) -> (i32, i32) {
    %c0_i32 = arith.constant 0 : i32
    %c0_i32_0 = arith.constant 0 : i32
    return %arg0, %c0_i32 : i32, i32
  }
}

</mosaic_0001>

<llo_original>
// kernel: tpu_custom_call.1
$region0: #{tpu_custom_call.1}
  #allocation0 [shape = 'u32[]', space=smem, size = 0x4, offset = 0x4, fixed_abs, tag = 'smem constant byte address 0x4 - core index']
  #allocation1 [shape = 'u32[144,128]{1,0:T(1,128)}', space=vmem, size = 0x12000, scoped, tag = 'internal scratch']
  %s0 = inlined_call_operand.vmem [shape: s32[8,1], index: 0, kind: input, shape index: {}]
  %s1 = inlined_call_operand.hbm [shape: f32[128,128], index: 1, kind: input, shape index: {}]
  %s2 = inlined_call_operand.hbm [shape: f32[128,128], index: 2, kind: input, shape index: {}]
  %s3 = inlined_call_operand.vmem [shape: f32[1,128], index: 3, kind: input, shape index: {}]
  %s4 = inlined_call_operand.hbm [shape: f32[128,128], index: 4, kind: input, shape index: {}]
  %s5 = inlined_call_operand.vmem [shape: f32[1,128], index: 5, kind: input, shape index: {}]
  %s6 = inlined_call_operand.hbm [shape: f32[8,128], index: 6, kind: output, shape index: {}]
  %s7 = sld [smem:[#allocation0]]
  $region46: #{tpu_custom_call.1} parent=0
    _
  %s9 = ssub.s32 1, %s7
  %s10 = scalar_select 0, %s9, %s7
  $region1: #{tpu_custom_call.1} parent=0
    #allocation2 [shape = 'u8[65536]{0}', space=vmem, size = 0x10000, scoped, tag = 'input window, operand 1, single buffered']
    #allocation3 [shape = 's32[1]{0}', space=sflag, size = 0x4, scoped, tag = 'scoped memory for tpu_custom_call.1']
    #allocation4 [shape = 's32[1]{0}', space=sflag, size = 0x4, scoped, tag = 'scoped memory for tpu_custom_call.1']
    #allocation5 [shape = 'u8[65536]{0}', space=vmem, size = 0x10000, scoped, tag = 'input window, operand 2, single buffered']
    #allocation6 [shape = 's32[1]{0}', space=sflag, size = 0x4, scoped, tag = 'scoped memory for tpu_custom_call.1']
    #allocation7 [shape = 'u8[65536]{0}', space=vmem, size = 0x10000, scoped, tag = 'input window, operand 4, single buffered']
    #allocation8 [shape = 'u8[4096]{0}', space=vmem, size = 0x1000, scoped, tag = 'output window, operand 0, single buffered']
    %11 = vsyncpa [#allocation3], 0
    %12 = vsyncpa [#allocation6], 0
    %13 = vsyncpa [#allocation4], 0
    // Predicated region
    $region2: #{tpu_custom_call.1} parent=1 // pred_check
      _
    $region3: #{tpu_custom_call.1} parent=1 // pred_check_branch
      %15 = sbr.rel (0) target = $region5
    $region4: #{tpu_custom_call.1} parent=1 // pred_region
      _
    $region5: #{tpu_custom_call.1} parent=1 // pred_fallthru
      _
    // Predicated region
    $region6: #{tpu_custom_call.1} parent=1 // pred_check
      _
    $region7: #{tpu_custom_call.1} parent=1 // pred_check_branch
      %17 = sbr.rel (0) target = $region9
    $region8: #{tpu_custom_call.1} parent=1 // pred_region
      %s19 = ssub.s32 2048, 2048
      %20 = vsyncadd [#allocation3], %s19
      %s21 = sshll.u32 [#allocation2], 4
      %s22 = int_to_ptr.vmem [resolvable:$true] %s21
      %27 = dma.hbm_to_vmem [thread:$0]  %s1, 2048, %s22, [#allocation3], 128, 128, 8
    $region9: #{tpu_custom_call.1} parent=1 // pred_fallthru
      _
    // Predicated region
    $region10: #{tpu_custom_call.1} parent=1 // pred_check
      _
    $region11: #{tpu_custom_call.1} parent=1 // pred_check_branch
      %29 = sbr.rel (0) target = $region13
    $region12: #{tpu_custom_call.1} parent=1 // pred_region
      %s31 = ssub.s32 2048, 2048
      %32 = vsyncadd [#allocation6], %s31
      %s33 = sshll.u32 [#allocation5], 4
      %s34 = int_to_ptr.vmem [resolvable:$true] %s33
      %39 = dma.hbm_to_vmem [thread:$0]  %s2, 2048, %s34, [#allocation6], 128, 128, 8
    $region13: #{tpu_custom_call.1} parent=1 // pred_fallthru
      _
    // Predicated region
    $region14: #{tpu_custom_call.1} parent=1 // pred_check
      _
    $region15: #{tpu_custom_call.1} parent=1 // pred_check_branch
      %41 = sbr.rel (0) target = $region17
    $region16: #{tpu_custom_call.1} parent=1 // pred_region
      _
    $region17: #{tpu_custom_call.1} parent=1 // pred_fallthru
      _
    // Predicated region
    $region18: #{tpu_custom_call.1} parent=1 // pred_check
      _
    $region19: #{tpu_custom_call.1} parent=1 // pred_check_branch
      %43 = sbr.rel (0) target = $region21
    $region20: #{tpu_custom_call.1} parent=1 // pred_region
      %s45 = ssub.s32 2048, 2048
      %46 = vsyncadd [#allocation6], %s45
      %s47 = sshll.u32 [#allocation7], 4
      %s48 = int_to_ptr.vmem [resolvable:$true] %s47
      %53 = dma.hbm_to_vmem [thread:$0]  %s4, 2048, %s48, [#allocation6], 128, 128, 8
    $region21: #{tpu_custom_call.1} parent=1 // pred_fallthru
      _
    // Predicated region
    $region22: #{tpu_custom_call.1} parent=1 // pred_check
      _
    $region23: #{tpu_custom_call.1} parent=1 // pred_check_branch
      %55 = sbr.rel (0) target = $region25
    $region24: #{tpu_custom_call.1} parent=1 // pred_region
      _
    $region25: #{tpu_custom_call.1} parent=1 // pred_fallthru
      _
    // Predicated region
    $region26: #{tpu_custom_call.1} parent=1 // pred_check
      _
    $region27: #{tpu_custom_call.1} parent=1 // pred_check_branch
      %57 = sbr.rel (0) target = $region29
    $region28: #{tpu_custom_call.1} parent=1 // pred_region
      %58 = dma.done [#allocation3], 2048
    $region29: #{tpu_custom_call.1} parent=1 // pred_fallthru
      _
    // Predicated region
    $region30: #{tpu_custom_call.1} parent=1 // pred_check
      _
    $region31: #{tpu_custom_call.1} parent=1 // pred_check_branch
      %60 = sbr.rel (0) target = $region33
    $region32: #{tpu_custom_call.1} parent=1 // pred_region
      %61 = dma.done [#allocation6], 2048
    $region33: #{tpu_custom_call.1} parent=1 // pred_fallthru
      _
    // Predicated region
    $region34: #{tpu_custom_call.1} parent=1 // pred_check
      _
    $region35: #{tpu_custom_call.1} parent=1 // pred_check_branch
      %63 = sbr.rel (0) target = $region37
    $region36: #{tpu_custom_call.1} parent=1 // pred_region
      %64 = dma.done [#allocation6], 2048
    $region37: #{tpu_custom_call.1} parent=1 // pred_fallthru
      _
    %v65 = vld [vmem:[%s0] sm:$0xff]
    %v66 = vlaneseq
    %v67 = vand.u32 %v66, 127
    %68 = vset.pattern.permute.xlu0 0
    %69 = vperm.xlu0 %68, %v65
    %v70 = vpop.permute.xlu0 %69
    %vm71 = vcmp.eq.s32.totalorder %v67, %v70
    %v72 = vsel %vm71, 1, 0
    %v73 = vcvt.s32.f32 %v72
    %v74 = vld [vmem:[#allocation2] sm:$0xff]
    %v75 = vld [vmem:[#allocation2 + $0x8] sm:$0xff]
    %v76 = vld [vmem:[#allocation2 + $0x10] sm:$0xff]
    %v77 = vld [vmem:[#allocation2 + $0x18] sm:$0xff]
    %v78 = vld [vmem:[#allocation2 + $0x20] sm:$0xff]
    %v79 = vld [vmem:[#allocation2 + $0x28] sm:$0xff]
    %v80 = vld [vmem:[#allocation2 + $0x30] sm:$0xff]
    %v81 = vld [vmem:[#allocation2 + $0x38] sm:$0xff]
    %v82 = vld [vmem:[#allocation2 + $0x40] sm:$0xff]
    %v83 = vld [vmem:[#allocation2 + $0x48] sm:$0xff]
    %v84 = vld [vmem:[#allocation2 + $0x50] sm:$0xff]
    %v85 = vld [vmem:[#allocation2 + $0x58] sm:$0xff]
    %v86 = vld [vmem:[#allocation2 + $0x60] sm:$0xff]
    %v87 = vld [vmem:[#allocation2 + $0x68] sm:$0xff]
    %v88 = vld [vmem:[#allocation2 + $0x70] sm:$0xff]
    %v89 = vld [vmem:[#allocation2 + $0x78] sm:$0xff]
    %90 = vmatprep.subr.mxu0 0.0
    %91 = vmatpush1.msra.mxu0 %v74
    %92 = vmatprep.subr.mxu0 0.0
    %93 = vmatpush1.msra.mxu0 %v75
    %94 = vmatprep.subr.mxu0 0.0
    %95 = vmatpush1.msra.mxu0 %v76
    %96 = vmatprep.subr.mxu0 0.0
    %97 = vmatpush1.msra.mxu0 %v77
    %98 = vmatprep.subr.mxu0 0.0
    %99 = vmatpush1.msra.mxu0 %v78
    %100 = vmatprep.subr.mxu0 0.0
    %101 = vmatpush1.msra.mxu0 %v79
    %102 = vmatprep.subr.mxu0 0.0
    %103 = vmatpush1.msra.mxu0 %v80
    %104 = vmatprep.subr.mxu0 0.0
    %105 = vmatpush1.msra.mxu0 %v81
    %106 = vmatprep.subr.mxu0 0.0
    %107 = vmatpush1.msra.mxu0 %v82
    %108 = vmatprep.subr.mxu0 0.0
    %109 = vmatpush1.msra.mxu0 %v83
    %110 = vmatprep.subr.mxu0 0.0
    %111 = vmatpush1.msra.mxu0 %v84
    %112 = vmatprep.subr.mxu0 0.0
    %113 = vmatpush1.msra.mxu0 %v85
    %114 = vmatprep.subr.mxu0 0.0
    %115 = vmatpush1.msra.mxu0 %v86
    %116 = vmatprep.subr.mxu0 0.0
    %117 = vmatpush1.msra.mxu0 %v87
    %118 = vmatprep.subr.mxu0 0.0
    %119 = vmatpush1.msra.mxu0 %v88
    %120 = vmatprep.subr.mxu0 0.0
    %121 = vmatpush1.msra.mxu0 %v89
    %122 = vmatprep.subr.mxu0 0.0
    %123 = vmatpush1.msra.mxu0 0.0
    %124 = vmatprep.subr.mxu0 0.0
    %125 = vmatpush1.msra.mxu0 0.0
    %126 = vmatprep.subr.mxu0 0.0
    %127 = vmatpush1.msra.mxu0 0.0
    %128 = vmatprep.subr.mxu0 0.0
    %129 = vmatpush1.msra.mxu0 0.0
    %130 = vmatprep.subr.mxu0 0.0
    %131 = vmatpush1.msra.mxu0 0.0
    %132 = vmatprep.subr.mxu0 0.0
    %133 = vmatpush1.msra.mxu0 0.0
    %134 = vmatprep.subr.mxu0 0.0
    %135 = vmatpush1.msra.mxu0 0.0
    %136 = vmatprep.subr.mxu0 0.0
    %137 = vmatpush1.msra.mxu0 0.0
    %138 = vmatprep.subr.mxu0 0.0
    %139 = vmatpush1.msra.mxu0 0.0
    %140 = vmatprep.subr.mxu0 0.0
    %141 = vmatpush1.msra.mxu0 0.0
    %142 = vmatprep.subr.mxu0 0.0
    %143 = vmatpush1.msra.mxu0 0.0
    %144 = vmatprep.subr.mxu0 0.0
    %145 = vmatpush1.msra.mxu0 0.0
    %146 = vmatprep.subr.mxu0 0.0
    %147 = vmatpush1.msra.mxu0 0.0
    %148 = vmatprep.subr.mxu0 0.0
    %149 = vmatpush1.msra.mxu0 0.0
    %150 = vmatprep.subr.mxu0 0.0
    %151 = vmatpush1.msra.mxu0 0.0
    %152 = vmatprep.subr.mxu0 0.0
    %153 = vmatpush1.msra.mxu0 0.0
    %154 = vmatprep.mubr.f32.mxu0 0.0
    %155 = vmatmul.mubr.f32.gmra.mrb[0].mxu0 %v73
    %v156 = vpop.f32.mrb[0].mxu0
    %v157 = vadd.f32 0.0, %v156
    %v158 = vpop.f32.mrb[0].mxu0
    %159 = vdwg.mxu0
    %v160 = vld [vmem:[#allocation5] sm:$0xff]
    %v161 = vld [vmem:[#allocation5 + $0x8] sm:$0xff]
    %v162 = vld [vmem:[#allocation5 + $0x10] sm:$0xff]
    %v163 = vld [vmem:[#allocation5 + $0x18] sm:$0xff]
    %v164 = vld [vmem:[#allocation5 + $0x20] sm:$0xff]
    %v165 = vld [vmem:[#allocation5 + $0x28] sm:$0xff]
    %v166 = vld [vmem:[#allocation5 + $0x30] sm:$0xff]
    %v167 = vld [vmem:[#allocation5 + $0x38] sm:$0xff]
    %v168 = vld [vmem:[#allocation5 + $0x40] sm:$0xff]
    %v169 = vld [vmem:[#allocation5 + $0x48] sm:$0xff]
    %v170 = vld [vmem:[#allocation5 + $0x50] sm:$0xff]
    %v171 = vld [vmem:[#allocation5 + $0x58] sm:$0xff]
    %v172 = vld [vmem:[#allocation5 + $0x60] sm:$0xff]
    %v173 = vld [vmem:[#allocation5 + $0x68] sm:$0xff]
    %v174 = vld [vmem:[#allocation5 + $0x70] sm:$0xff]
    %v175 = vld [vmem:[#allocation5 + $0x78] sm:$0xff]
    %v176 = vld [vmem:[%s3] sm:$0x1]
    %v178 = vlaneseq
    %v179 = vshrl.u32 %v178, 7
    %v180 = vsub.s32 0, %v179
    %v181 = vrot.slane %v176, %v180
    %183 = vmatprep.subr.mxu0 0.0
    %184 = vmatpush1.msra.mxu0 %v160
    %185 = vmatprep.subr.mxu0 0.0
    %186 = vmatpush1.msra.mxu0 %v161
    %187 = vmatprep.subr.mxu0 0.0
    %188 = vmatpush1.msra.mxu0 %v162
    %189 = vmatprep.subr.mxu0 0.0
    %190 = vmatpush1.msra.mxu0 %v163
    %191 = vmatprep.subr.mxu0 0.0
    %192 = vmatpush1.msra.mxu0 %v164
    %193 = vmatprep.subr.mxu0 0.0
    %194 = vmatpush1.msra.mxu0 %v165
    %195 = vmatprep.subr.mxu0 0.0
    %196 = vmatpush1.msra.mxu0 %v166
    %197 = vmatprep.subr.mxu0 0.0
    %198 = vmatpush1.msra.mxu0 %v167
    %199 = vmatprep.subr.mxu0 0.0
    %200 = vmatpush1.msra.mxu0 %v168
    %201 = vmatprep.subr.mxu0 0.0
    %202 = vmatpush1.msra.mxu0 %v169
    %203 = vmatprep.subr.mxu0 0.0
    %204 = vmatpush1.msra.mxu0 %v170
    %205 = vmatprep.subr.mxu0 0.0
    %206 = vmatpush1.msra.mxu0 %v171
    %207 = vmatprep.subr.mxu0 0.0
    %208 = vmatpush1.msra.mxu0 %v172
    %209 = vmatprep.subr.mxu0 0.0
    %210 = vmatpush1.msra.mxu0 %v173
    %211 = vmatprep.subr.mxu0 0.0
    %212 = vmatpush1.msra.mxu0 %v174
    %213 = vmatprep.subr.mxu0 0.0
    %214 = vmatpush1.msra.mxu0 %v175
    %215 = vmatprep.subr.mxu0 0.0
    %216 = vmatpush1.msra.mxu0 0.0
    %217 = vmatprep.subr.mxu0 0.0
    %218 = vmatpush1.msra.mxu0 0.0
    %219 = vmatprep.subr.mxu0 0.0
    %220 = vmatpush1.msra.mxu0 0.0
    %221 = vmatprep.subr.mxu0 0.0
    %222 = vmatpush1.msra.mxu0 0.0
    %223 = vmatprep.subr.mxu0 0.0
    %224 = vmatpush1.msra.mxu0 0.0
    %225 = vmatprep.subr.mxu0 0.0
    %226 = vmatpush1.msra.mxu0 0.0
    %227 = vmatprep.subr.mxu0 0.0
    %228 = vmatpush1.msra.mxu0 0.0
    %229 = vmatprep.subr.mxu0 0.0
    %230 = vmatpush1.msra.mxu0 0.0
    %231 = vmatprep.subr.mxu0 0.0
    %232 = vmatpush1.msra.mxu0 0.0
    %233 = vmatprep.subr.mxu0 0.0
    %234 = vmatpush1.msra.mxu0 0.0
    %235 = vmatprep.subr.mxu0 0.0
    %236 = vmatpush1.msra.mxu0 0.0
    %237 = vmatprep.subr.mxu0 0.0
    %238 = vmatpush1.msra.mxu0 0.0
    %239 = vmatprep.subr.mxu0 0.0
    %240 = vmatpush1.msra.mxu0 0.0
    %241 = vmatprep.subr.mxu0 0.0
    %242 = vmatpush1.msra.mxu0 0.0
    %243 = vmatprep.subr.mxu0 0.0
    %244 = vmatpush1.msra.mxu0 0.0
    %245 = vmatprep.subr.mxu0 0.0
    %246 = vmatpush1.msra.mxu0 0.0
    %247 = vmatprep.mubr.f32.mxu0 0.0
    %248 = vmatmul.mubr.f32.gmra.mrb[0].mxu0 %v157
    %v249 = vpop.f32.mrb[0].mxu0
    %v250 = vadd.f32 %v181, %v249
    %v251 = vpop.f32.mrb[0].mxu0
    %252 = vdwg.mxu0
    %v253 = vxor.u32 %v250, 2147483648
    %v254 = vmul.f32 %v253, 1.442695
    %v255 = vpow.pop %v254
    %v256 = vadd.f32 %v255, 1.0
    %v257 = vrcp.pop %v256
    %v258 = vmul.f32 1.0, %v257
    %v259 = vmul.f32 %v250, %v258
    %v260 = vld [vmem:[#allocation7] sm:$0xff]
    %v261 = vld [vmem:[#allocation7 + $0x8] sm:$0xff]
    %v262 = vld [vmem:[#allocation7 + $0x10] sm:$0xff]
    %v263 = vld [vmem:[#allocation7 + $0x18] sm:$0xff]
    %v264 = vld [vmem:[#allocation7 + $0x20] sm:$0xff]
    %v265 = vld [vmem:[#allocation7 + $0x28] sm:$0xff]
    %v266 = vld [vmem:[#allocation7 + $0x30] sm:$0xff]
    %v267 = vld [vmem:[#allocation7 + $0x38] sm:$0xff]
    %v268 = vld [vmem:[#allocation7 + $0x40] sm:$0xff]
    %v269 = vld [vmem:[#allocation7 + $0x48] sm:$0xff]
    %v270 = vld [vmem:[#allocation7 + $0x50] sm:$0xff]
    %v271 = vld [vmem:[#allocation7 + $0x58] sm:$0xff]
    %v272 = vld [vmem:[#allocation7 + $0x60] sm:$0xff]
    %v273 = vld [vmem:[#allocation7 + $0x68] sm:$0xff]
    %v274 = vld [vmem:[#allocation7 + $0x70] sm:$0xff]
    %v275 = vld [vmem:[#allocation7 + $0x78] sm:$0xff]
    %v276 = vld [vmem:[%s5] sm:$0x1]
    %v278 = vlaneseq
    %v279 = vshrl.u32 %v278, 7
    %v280 = vsub.s32 0, %v279
    %v281 = vrot.slane %v276, %v280
    %283 = vmatprep.subr.mxu0 0.0
    %284 = vmatpush1.msra.mxu0 %v260
    %285 = vmatprep.subr.mxu0 0.0
    %286 = vmatpush1.msra.mxu0 %v261
    %287 = vmatprep.subr.mxu0 0.0
    %288 = vmatpush1.msra.mxu0 %v262
    %289 = vmatprep.subr.mxu0 0.0
    %290 = vmatpush1.msra.mxu0 %v263
    %291 = vmatprep.subr.mxu0 0.0
    %292 = vmatpush1.msra.mxu0 %v264
    %293 = vmatprep.subr.mxu0 0.0
    %294 = vmatpush1.msra.mxu0 %v265
    %295 = vmatprep.subr.mxu0 0.0
    %296 = vmatpush1.msra.mxu0 %v266
    %297 = vmatprep.subr.mxu0 0.0
    %298 = vmatpush1.msra.mxu0 %v267
    %299 = vmatprep.subr.mxu0 0.0
    %300 = vmatpush1.msra.mxu0 %v268
    %301 = vmatprep.subr.mxu0 0.0
    %302 = vmatpush1.msra.mxu0 %v269
    %303 = vmatprep.subr.mxu0 0.0
    %304 = vmatpush1.msra.mxu0 %v270
    %305 = vmatprep.subr.mxu0 0.0
    %306 = vmatpush1.msra.mxu0 %v271
    %307 = vmatprep.subr.mxu0 0.0
    %308 = vmatpush1.msra.mxu0 %v272
    %309 = vmatprep.subr.mxu0 0.0
    %310 = vmatpush1.msra.mxu0 %v273
    %311 = vmatprep.subr.mxu0 0.0
    %312 = vmatpush1.msra.mxu0 %v274
    %313 = vmatprep.subr.mxu0 0.0
    %314 = vmatpush1.msra.mxu0 %v275
    %315 = vmatprep.subr.mxu0 0.0
    %316 = vmatpush1.msra.mxu0 0.0
    %317 = vmatprep.subr.mxu0 0.0
    %318 = vmatpush1.msra.mxu0 0.0
    %319 = vmatprep.subr.mxu0 0.0
    %320 = vmatpush1.msra.mxu0 0.0
    %321 = vmatprep.subr.mxu0 0.0
    %322 = vmatpush1.msra.mxu0 0.0
    %323 = vmatprep.subr.mxu0 0.0
    %324 = vmatpush1.msra.mxu0 0.0
    %325 = vmatprep.subr.mxu0 0.0
    %326 = vmatpush1.msra.mxu0 0.0
    %327 = vmatprep.subr.mxu0 0.0
    %328 = vmatpush1.msra.mxu0 0.0
    %329 = vmatprep.subr.mxu0 0.0
    %330 = vmatpush1.msra.mxu0 0.0
    %331 = vmatprep.subr.mxu0 0.0
    %332 = vmatpush1.msra.mxu0 0.0
    %333 = vmatprep.subr.mxu0 0.0
    %334 = vmatpush1.msra.mxu0 0.0
    %335 = vmatprep.subr.mxu0 0.0
    %336 = vmatpush1.msra.mxu0 0.0
    %337 = vmatprep.subr.mxu0 0.0
    %338 = vmatpush1.msra.mxu0 0.0
    %339 = vmatprep.subr.mxu0 0.0
    %340 = vmatpush1.msra.mxu0 0.0
    %341 = vmatprep.subr.mxu0 0.0
    %342 = vmatpush1.msra.mxu0 0.0
    %343 = vmatprep.subr.mxu0 0.0
    %344 = vmatpush1.msra.mxu0 0.0
    %345 = vmatprep.subr.mxu0 0.0
    %346 = vmatpush1.msra.mxu0 0.0
    %347 = vmatprep.mubr.f32.mxu0 0.0
    %348 = vmatmul.mubr.f32.gmra.mrb[0].mxu0 %v259
    %v349 = vpop.f32.mrb[0].mxu0
    %v350 = vadd.f32 %v281, %v349
    %v351 = vpop.f32.mrb[0].mxu0
    %352 = vdwg.mxu0
    %353 = vst [vmem:[#allocation8] sm:$0xff] %v350
    // Predicated region
    $region38: #{tpu_custom_call.1} parent=1 // pred_check
      _
    $region39: #{tpu_custom_call.1} parent=1 // pred_check_branch
      %355 = sbr.rel (0) target = $region41
    $region40: #{tpu_custom_call.1} parent=1 // pred_region
      %s357 = ssub.s32 128, 128
      %358 = vsyncadd [#allocation4], %s357
      %s360 = sshll.u32 [#allocation8], 4
      %s361 = int_to_ptr.vmem [resolvable:$true] %s360
      %363 = dma.vmem_to_hbm [thread:$0]  %s361, 128, %s6, [#allocation4]
    $region41: #{tpu_custom_call.1} parent=1 // pred_fallthru
      _
    // Predicated region
    $region42: #{tpu_custom_call.1} parent=1 // pred_check
      _
    $region43: #{tpu_custom_call.1} parent=1 // pred_check_branch
      %365 = sbr.rel (0) target = $region45
    $region44: #{tpu_custom_call.1} parent=1 // pred_region
      %366 = dma.done [#allocation4], 128
    $region45: #{tpu_custom_call.1} parent=1 // pred_fallthru
      _
    %367 = vsyncpa [#allocation3], 1
    %368 = vsyncpa [#allocation6], 1
    %369 = vsyncpa [#allocation4], 1

</llo_original>
